<compile_context>
chip_gen: v7x
topology: tpu7x:2x2x1
jax: 0.10.0
libtpu: 0.0.40
codegen_flags: <defaults>
</compile_context>

<pallas_src>
import math

import jax
import jax.numpy as jnp
import numpy as np
from jax.experimental import pallas as pl
from jax.experimental.pallas import tpu as pltpu


def _round_up(x: int, m: int) -> int:
    return (x + m - 1) // m * m


# ---------------------------------------------------------------------------
# Parameter construction (== KernelPolynomial.reset_parameters())
# ---------------------------------------------------------------------------
def init_kernel_polynomial_params(batch_size, kernel_type="none", max_order=2,
                                  mu=3, xi=4.0, stigma=0.5, heta=2):
    assert kernel_type in ["none", "dirichlet", "fejer", "jackson", "lanczos",
                           "lorentz", "vekic", "wang"]
    assert max_order >= 0 and mu >= 1
    kp1 = max_order + 1
    cheb = np.full((batch_size, kp1), 2.0 / kp1, dtype=np.float32)
    cheb[:, 0] = 1.0 / kp1
    damp = np.ones((batch_size, kp1), dtype=np.float32)
    k = np.arange(1, kp1, dtype=np.float64)
    if kernel_type == "fejer":
        damp[:, 1:] = 1.0 - k / kp1
    elif kernel_type == "jackson":
        c = math.pi / (max_order + 2)
        damp[:, 1:] = ((max_order + 2 - k) * math.sin(c) * np.cos(k * c)
                       + math.cos(c) * np.sin(k * c)) / ((max_order + 2) * math.sin(c))
    elif kernel_type == "lanczos":
        damp[:, 1:] = np.sinc(k / kp1)
        damp = damp ** mu
    elif kernel_type == "lorentz":
        damp[:, 1:] = np.sinh(xi * (1.0 - k / kp1)) / math.sinh(xi)
    elif kernel_type == "vekic":
        # NOTE: torch reference indexes gibbs_damp[k] (a row) here; we use the
        # intended per-order value (deliberate deviation in parameter init only).
        t = k / kp1
        damp[:, 1:] = 0.5 * (1.0 - np.tanh((t - 0.5) / (t * (1.0 - t))))
    elif kernel_type == "wang":
        damp[:, 1:] = k / (stigma * kp1)
        damp = np.exp(-(damp ** heta))
    return jnp.asarray(cheb, jnp.float32), jnp.asarray(damp, jnp.float32)


# ---------------------------------------------------------------------------
# Pallas kernel: one (tile_b, tile_n) tile of seq, weight rows for that tile
# ---------------------------------------------------------------------------
_UNROLL_MAX_KP1 = 16   # fully unroll the recurrence when K+1 <= this


def _cheb_gibbs_kernel(seq_ref, w_ref, out_ref):
    x = seq_ref[...].astype(jnp.float32)          # (tile_b, tile_n)
    w = w_ref[...]                                # (tile_b, K+1) f32
    kp1 = w.shape[1]

    acc = jnp.broadcast_to(w[:, 0:1], x.shape)    # T_0 = 1 term
    if kp1 >= 2:
        acc = acc + x * w[:, 1:2]                 # T_1 = x term
    if kp1 >= 3:
        two_x = x + x                             # hoisted: saves a mul per order
        if kp1 <= _UNROLL_MAX_KP1:
            tx_prev, tx_cur = jnp.ones_like(x), x
            for k in range(2, kp1):               # statically unrolled recurrence
                tx_next = two_x * tx_cur - tx_prev
                acc = acc + tx_next * w[:, k:k + 1]
                tx_prev, tx_cur = tx_cur, tx_next
        else:
            # Large K: bounded live ranges via fori_loop; per-order weight column
            # picked with an iota mask + lane reduce (cheap: w is tiny).
            lane = jax.lax.broadcasted_iota(jnp.int32, w.shape, 1)

            def body(k, carry):
                tx_prev, tx_cur, a = carry
                tx_next = two_x * tx_cur - tx_prev
                w_k = jnp.sum(jnp.where(lane == k, w, 0.0), axis=1, keepdims=True)
                return (tx_cur, tx_next, a + tx_next * w_k)

            _, _, acc = jax.lax.fori_loop(2, kp1, body, (jnp.ones_like(x), x, acc))

    out_ref[...] = acc.astype(out_ref.dtype)


# ---------------------------------------------------------------------------
# Generation-aware VMEM budgets
# ---------------------------------------------------------------------------
def _vmem_budgets():
    phys = 64 * 1024 * 1024                       # conservative default (v7x per-TC)
    try:
        info = pltpu.get_tpu_info()
        phys = int(getattr(info, "vmem_capacity_bytes", phys)) or phys
    except Exception:
        pass
    phys = max(phys, 32 * 1024 * 1024)
    total = min(phys // 4, 24 * 1024 * 1024)      # 2 input + 2 output buffers
    per_buf = total // 4
    vmem_limit = int(max(16 * 1024 * 1024,
                         min(phys - 8 * 1024 * 1024, total + 16 * 1024 * 1024)))
    return per_buf, vmem_limit


# ---------------------------------------------------------------------------
# Wrapper (== KernelPolynomial.forward)
# ---------------------------------------------------------------------------
def kernel_polynomial(seq: jax.Array, cheb_coef: jax.Array,
                      gibbs_damp: jax.Array) -> jax.Array:
    assert seq.ndim == 2, "seq must be (batch_size, seq_len)"
    B, N = seq.shape
    kp1 = cheb_coef.shape[1]
    assert cheb_coef.shape == (B, kp1) and gibbs_damp.shape == (B, kp1)

    # Fold Gibbs damping into the Chebyshev coefficients (damp[:, 0] is never
    # used by the reference forward).  Tiny (B, K+1) arrays -> negligible HLOs.
    w = jnp.concatenate(
        [cheb_coef[:, :1], cheb_coef[:, 1:] * gibbs_damp[:, 1:]], axis=1
    ).astype(jnp.float32)

    itemsize = jnp.dtype(seq.dtype).itemsize
    sub = {1: 32, 2: 16}.get(itemsize, 8)         # dtype-aware sublane count

    # --- sublane-density fix: fold (B, N) -> (B*r, N/r) when B < sublane ----
    r = 1
    if B < sub and N > 1:
        r = max(1, sub // B)
        while r > 1 and N % r != 0:
            r -= 1
    if r > 1:
        x2d = seq.reshape(B * r, N // r)          # contiguous, data-movement-free
        w2d = jnp.repeat(w, r, axis=0)
        rows, cols = B * r, N // r
    else:
        x2d, w2d, rows, cols = seq, w, B, N

    buf_budget, vmem_limit = _vmem_budgets()

    # --- row tiling (keeps tile_n >= 512 lanes even for huge B) -------------
    TILE_B_CAP, MIN_TILE_N, SMALL_N, MIN_STEPS = 512, 512, 512, 4
    if rows <= TILE_B_CAP:
        tile_b, grid_b = rows, 1                  # full extent: legal for any rows
    else:
        tile_b = TILE_B_CAP                       # multiple of 8/16/32 sublanes
        while tile_b > sub and _round_up(tile_b, sub) * itemsize * MIN_TILE_N > buf_budget:
            tile_b -= sub
        grid_b = pl.cdiv(rows, tile_b)            # ragged edge masked by Pallas

    # --- column tiling -------------------------------------------------------
    rows_vmem = _round_up(tile_b, sub)
    tile_n_cap = max(128, (buf_budget // (rows_vmem * itemsize)) // 128 * 128)

    if cols <= SMALL_N:
        tile_n, grid_n = cols, 1                  # full-extent block: no pad, any length
    else:
        want_n_steps = max(1, pl.cdiv(MIN_STEPS, grid_b))   # pipelining + both v7x TCs
        grid_n_target = max(want_n_steps, pl.cdiv(cols, tile_n_cap))
        tile_n = min(tile_n_cap, max(128, _round_up(pl.cdiv(cols, grid_n_target), 128)))
        grid_n = pl.cdiv(cols, tile_n)            # 128-multiple tiles, masked edge

    max_order = kp1 - 1
    cost = pl.CostEstimate(
        flops=rows * cols * (2 + 4 * max(0, max_order - 1) + (1 if max_order >= 2 else 0)),
        transcendentals=0,
        bytes_accessed=2 * rows * cols * itemsize + rows * kp1 * 4,
    )

    out = pl.pallas_call(
        _cheb_gibbs_kernel,
        out_shape=jax.ShapeDtypeStruct((rows, cols), seq.dtype),
        grid=(grid_b, grid_n),
        in_specs=[
            pl.BlockSpec((tile_b, tile_n), lambda i, j: (i, j)),
            pl.BlockSpec((tile_b, kp1), lambda i, j: (i, 0)),   # weights resident over j
        ],
        out_specs=pl.BlockSpec((tile_b, tile_n), lambda i, j: (i, j)),
        compiler_params=pltpu.CompilerParams(
            dimension_semantics=("parallel", "parallel"),
            vmem_limit_bytes=vmem_limit,
        ),
        cost_estimate=cost,
    )(x2d, w2d)

    if r > 1:
        out = out.reshape(B, N)
    return out


# ---------------------------------------------------------------------------
# Pure-JAX reference (mirrors the PyTorch forward exactly)
# ---------------------------------------------------------------------------
def kernel_polynomial_ref(seq, cheb_coef, gibbs_damp):
    K = cheb_coef.shape[1] - 1
    tx0 = jnp.ones_like(seq)
    out = tx0 * cheb_coef[:, 0:1]
    if K == 0:
        return out
    tx1 = seq
    out = out + tx1 * cheb_coef[:, 1:2] * gibbs_damp[:, 1:2]
    for k in range(2, K + 1):
        tx2 = 2.0 * seq * tx1 - tx0
        out = out + tx2 * cheb_coef[:, k:k + 1] * gibbs_damp[:, k:k + 1]
        tx0, tx1 = tx1, tx2
    return out


if __name__ == "__main__":
    key = jax.random.PRNGKey(0)

    # 1) Small jackson kernel (exercises the sublane fold + single-block path).
    B, N, K = 2, 256, 4
    cheb, damp = init_kernel_polynomial_params(B, "jackson", K)
    seq = jax.random.uniform(key, (B, N), jnp.float32, minval=-1.0, maxval=1.0)
    y = jax.block_until_ready(kernel_polynomial(seq, cheb, damp))
    assert y.shape == seq.shape and y.dtype == seq.dtype
    assert jnp.allclose(y, kernel_polynomial_ref(seq, cheb, damp), atol=1e-5, rtol=1e-5)

    # 2) Unaligned seq_len, default config (full-extent no-pad path).
    cheb2, damp2 = init_kernel_polynomial_params(B, "none", 2)
    seq2 = jax.random.uniform(jax.random.PRNGKey(1), (B, 100), jnp.float32, -1.0, 1.0)
    y2 = jax.block_until_ready(kernel_polynomial(seq2, cheb2, damp2))
    assert jnp.allclose(y2, kernel_polynomial_ref(seq2, cheb2, damp2), atol=1e-5, rtol=1e-5)

    # 3) Longer sequence (exercises the pipelined multi-step column grid).
    seq3 = jax.random.uniform(jax.random.PRNGKey(2), (B, 4096), jnp.float32, -1.0, 1.0)
    y3 = jax.block_until_ready(kernel_polynomial(seq3, cheb, damp))
    assert jnp.allclose(y3, kernel_polynomial_ref(seq3, cheb, damp), atol=1e-5, rtol=1e-5)

    # 4) Large max_order (exercises the fori_loop recurrence path).
    cheb4, damp4 = init_kernel_polynomial_params(3, "none", 40)
    seq4 = jax.random.uniform(jax.random.PRNGKey(3), (3, 640), jnp.float32, -1.0, 1.0)
    y4 = jax.block_until_ready(kernel_polynomial(seq4, cheb4, damp4))
    assert jnp.allclose(y4, kernel_polynomial_ref(seq4, cheb4, damp4), atol=1e-4, rtol=1e-4)

    print("KERNEL_OK")
</pallas_src>

<mosaic_0001>
module attributes {stable_mosaic.version = 11 : i64} {
  func.func @_cheb_gibbs_kernel(%arg0: i32, %arg1: i32, %arg2: memref<8x64xf32, #tpu.memory_space<vmem>>, %arg3: memref<8x5xf32, #tpu.memory_space<vmem>>, %arg4: memref<8x64xf32, #tpu.memory_space<vmem>>) attributes {dimension_semantics = [#tpu.dimension_semantics<parallel>, #tpu.dimension_semantics<parallel>], iteration_bounds = array<i64: 1, 1>, scalar_prefetch = 0 : i64, scratch_operands = 0 : i64, tpu.core_type = #tpu.core_type<tc>, window_params = [{transform_indices = @transform_0, window_bounds = array<i64: 8, 64>}, {transform_indices = @transform_1, window_bounds = array<i64: 8, 5>}, {transform_indices = @transform_2, window_bounds = array<i64: 8, 64>}]} {
    %c0 = arith.constant 0 : index
    %c0_0 = arith.constant 0 : index
    %0 = vector.load %arg2[%c0, %c0_0] : memref<8x64xf32, #tpu.memory_space<vmem>>, vector<8x64xf32>
    %c0_1 = arith.constant 0 : index
    %c0_2 = arith.constant 0 : index
    %1 = vector.load %arg3[%c0_1, %c0_2] : memref<8x5xf32, #tpu.memory_space<vmem>>, vector<8x5xf32>
    %2 = vector.extract_strided_slice %1 {offsets = [0, 0], sizes = [8, 1], strides = [1, 1]} : vector<8x5xf32> to vector<8x1xf32>
    %3 = vector.shape_cast %2 : vector<8x1xf32> to vector<8x1xf32>
    %4 = vector.broadcast %3 : vector<8x1xf32> to vector<8x64xf32>
    %5 = vector.extract_strided_slice %1 {offsets = [0, 1], sizes = [8, 1], strides = [1, 1]} : vector<8x5xf32> to vector<8x1xf32>
    %6 = vector.broadcast %5 : vector<8x1xf32> to vector<8x64xf32>
    %7 = arith.mulf %0, %6 : vector<8x64xf32>
    %8 = arith.addf %4, %7 : vector<8x64xf32>
    %9 = arith.addf %0, %0 : vector<8x64xf32>
    %cst = arith.constant 1.000000e+00 : f32
    %10 = vector.broadcast %cst : f32 to vector<8x64xf32>
    %11 = arith.mulf %9, %0 : vector<8x64xf32>
    %12 = arith.subf %11, %10 : vector<8x64xf32>
    %13 = vector.extract_strided_slice %1 {offsets = [0, 2], sizes = [8, 1], strides = [1, 1]} : vector<8x5xf32> to vector<8x1xf32>
    %14 = vector.broadcast %13 : vector<8x1xf32> to vector<8x64xf32>
    %15 = arith.mulf %12, %14 : vector<8x64xf32>
    %16 = arith.addf %8, %15 : vector<8x64xf32>
    %17 = arith.mulf %9, %12 : vector<8x64xf32>
    %18 = arith.subf %17, %0 : vector<8x64xf32>
    %19 = vector.extract_strided_slice %1 {offsets = [0, 3], sizes = [8, 1], strides = [1, 1]} : vector<8x5xf32> to vector<8x1xf32>
    %20 = vector.broadcast %19 : vector<8x1xf32> to vector<8x64xf32>
    %21 = arith.mulf %18, %20 : vector<8x64xf32>
    %22 = arith.addf %16, %21 : vector<8x64xf32>
    %23 = arith.mulf %9, %18 : vector<8x64xf32>
    %24 = arith.subf %23, %12 : vector<8x64xf32>
    %25 = vector.extract_strided_slice %1 {offsets = [0, 4], sizes = [8, 1], strides = [1, 1]} : vector<8x5xf32> to vector<8x1xf32>
    %26 = vector.broadcast %25 : vector<8x1xf32> to vector<8x64xf32>
    %27 = arith.mulf %24, %26 : vector<8x64xf32>
    %28 = arith.addf %22, %27 : vector<8x64xf32>
    %c0_3 = arith.constant 0 : index
    %c0_4 = arith.constant 0 : index
    %29 = vector.load %arg4[%c0_3, %c0_4] : memref<8x64xf32, #tpu.memory_space<vmem>>, vector<8x64xf32>
    tpu.vector_store %arg4[%c0_3, %c0_4], %28 {strides = array<i32>} : memref<8x64xf32, #tpu.memory_space<vmem>>, vector<8x64xf32>,
    return
  }
  func.func @transform_0(%arg0: i32, %arg1: i32) -> (i32, i32) {
    %c0_i32 = arith.constant 0 : i32
    return %arg0, %arg1 : i32, i32
  }
  func.func @transform_1(%arg0: i32, %arg1: i32) -> (i32, i32) {
    %c0_i32 = arith.constant 0 : i32
    %c0_i32_0 = arith.constant 0 : i32
    return %arg0, %c0_i32 : i32, i32
  }
  func.func @transform_2(%arg0: i32, %arg1: i32) -> (i32, i32) {
    %c0_i32 = arith.constant 0 : i32
    return %arg0, %arg1 : i32, i32
  }
}

</mosaic_0001>

<llo_original>
// kernel: tpu_custom_call.1
$region0: #{tpu_custom_call.1}
  #allocation0 [shape = 'u32[]', space=smem, size = 0x4, offset = 0x4, fixed_abs, tag = 'smem constant byte address 0x4 - core index']
  #allocation1 [shape = 'u32[144,128]{1,0:T(1,128)}', space=vmem, size = 0x12000, scoped, tag = 'internal scratch']
  %s0 = inlined_call_operand.hbm [shape: f32[8,64], index: 0, kind: input, shape index: {}]
  %s1 = inlined_call_operand.hbm [shape: f32[8,5], index: 1, kind: input, shape index: {}]
  %s2 = inlined_call_operand.hbm [shape: f32[8,64], index: 2, kind: output, shape index: {}]
  %s3 = sld [smem:[#allocation0]]
  $region26: #{tpu_custom_call.1} parent=0
    _
  %s5 = ssub.s32 1, %s3
  %s6 = scalar_select 0, %s5, %s3
  $region1: #{tpu_custom_call.1} parent=0
    #allocation2 [shape = 'u8[4096]{0}', space=vmem, size = 0x1000, scoped, tag = 'input window, operand 0, single buffered']
    #allocation3 [shape = 's32[1]{0}', space=sflag, size = 0x4, scoped, tag = 'scoped memory for tpu_custom_call.1']
    #allocation4 [shape = 's32[1]{0}', space=sflag, size = 0x4, scoped, tag = 'scoped memory for tpu_custom_call.1']
    #allocation5 [shape = 'u8[4096]{0}', space=vmem, size = 0x1000, scoped, tag = 'input window, operand 1, single buffered']
    #allocation6 [shape = 's32[1]{0}', space=sflag, size = 0x4, scoped, tag = 'scoped memory for tpu_custom_call.1']
    #allocation7 [shape = 'u8[4096]{0}', space=vmem, size = 0x1000, scoped, tag = 'output window, operand 0, single buffered']
    %7 = vsyncpa [#allocation3], 0
    %8 = vsyncpa [#allocation6], 0
    %9 = vsyncpa [#allocation4], 0
    // Predicated region
    $region2: #{tpu_custom_call.1} parent=1 // pred_check
      _
    $region3: #{tpu_custom_call.1} parent=1 // pred_check_branch
      %11 = sbr.rel (0) target = $region5
    $region4: #{tpu_custom_call.1} parent=1 // pred_region
      %s13 = ssub.s32 128, 128
      %14 = vsyncadd [#allocation3], %s13
      %s16 = sshll.u32 [#allocation2], 4
      %s17 = int_to_ptr.vmem [resolvable:$true] %s16
      %19 = dma.hbm_to_vmem [thread:$0]  %s0, 128, %s17, [#allocation3]
    $region5: #{tpu_custom_call.1} parent=1 // pred_fallthru
      _
    // Predicated region
    $region6: #{tpu_custom_call.1} parent=1 // pred_check
      _
    $region7: #{tpu_custom_call.1} parent=1 // pred_check_branch
      %21 = sbr.rel (0) target = $region9
    $region8: #{tpu_custom_call.1} parent=1 // pred_region
      %s23 = ssub.s32 128, 128
      %24 = vsyncadd [#allocation6], %s23
      %s26 = sshll.u32 [#allocation5], 4
      %s27 = int_to_ptr.vmem [resolvable:$true] %s26
      %29 = dma.hbm_to_vmem [thread:$0]  %s1, 128, %s27, [#allocation6]
    $region9: #{tpu_custom_call.1} parent=1 // pred_fallthru
      _
    // Predicated region
    $region10: #{tpu_custom_call.1} parent=1 // pred_check
      _
    $region11: #{tpu_custom_call.1} parent=1 // pred_check_branch
      %31 = sbr.rel (0) target = $region13
    $region12: #{tpu_custom_call.1} parent=1 // pred_region
      %32 = dma.done [#allocation3], 128
    $region13: #{tpu_custom_call.1} parent=1 // pred_fallthru
      _
    // Predicated region
    $region14: #{tpu_custom_call.1} parent=1 // pred_check
      _
    $region15: #{tpu_custom_call.1} parent=1 // pred_check_branch
      %34 = sbr.rel (0) target = $region17
    $region16: #{tpu_custom_call.1} parent=1 // pred_region
      %35 = dma.done [#allocation6], 128
    $region17: #{tpu_custom_call.1} parent=1 // pred_fallthru
      _
    %v36 = vld [vmem:[#allocation2] sm:$0xff]
    %v37 = vld [vmem:[#allocation5] sm:$0xff]
    %39 = vset.pattern.permute.xlu0 0
    %40 = vperm.xlu0 %39, %v37
    %v41 = vpop.permute.xlu0 %40
    %43 = vset.pattern.permute.xlu0 1
    %44 = vperm.xlu0 %43, %v37
    %v45 = vpop.permute.xlu0 %44
    %v47 = vmul.f32 %v36, %v45
    %v48 = vadd.f32 %v41, %v47
    %v49 = vadd.f32 %v36, %v36
    %v50 = vmul.f32 %v49, %v36
    %v51 = vsub.f32 %v50, 1.0
    %52 = vset.pattern.permute.xlu0 2
    %53 = vperm.xlu0 %52, %v37
    %v54 = vpop.permute.xlu0 %53
    %v56 = vmul.f32 %v51, %v54
    %v57 = vadd.f32 %v48, %v56
    %v58 = vmul.f32 %v49, %v51
    %v59 = vsub.f32 %v58, %v36
    %60 = vset.pattern.permute.xlu0 3
    %61 = vperm.xlu0 %60, %v37
    %v62 = vpop.permute.xlu0 %61
    %v64 = vmul.f32 %v59, %v62
    %v65 = vadd.f32 %v57, %v64
    %v66 = vmul.f32 %v49, %v59
    %v67 = vsub.f32 %v66, %v51
    %68 = vset.pattern.permute.xlu0 4
    %69 = vperm.xlu0 %68, %v37
    %v70 = vpop.permute.xlu0 %69
    %v72 = vmul.f32 %v67, %v70
    %v73 = vadd.f32 %v65, %v72
    %vm74 = vcmask 523264
    %75 = vst.msk [vmem:[#allocation7] sm:$0xff] %vm74, %v73
    // Predicated region
    $region18: #{tpu_custom_call.1} parent=1 // pred_check
      _
    $region19: #{tpu_custom_call.1} parent=1 // pred_check_branch
      %77 = sbr.rel (0) target = $region21
    $region20: #{tpu_custom_call.1} parent=1 // pred_region
      %s79 = ssub.s32 128, 128
      %80 = vsyncadd [#allocation4], %s79
      %s82 = sshll.u32 [#allocation7], 4
      %s83 = int_to_ptr.vmem [resolvable:$true] %s82
      %85 = dma.vmem_to_hbm [thread:$0]  %s83, 128, %s2, [#allocation4]
    $region21: #{tpu_custom_call.1} parent=1 // pred_fallthru
      _
    // Predicated region
    $region22: #{tpu_custom_call.1} parent=1 // pred_check
      _
    $region23: #{tpu_custom_call.1} parent=1 // pred_check_branch
      %87 = sbr.rel (0) target = $region25
    $region24: #{tpu_custom_call.1} parent=1 // pred_region
      %88 = dma.done [#allocation4], 128
    $region25: #{tpu_custom_call.1} parent=1 // pred_fallthru
      _
    %89 = vsyncpa [#allocation3], 1
    %90 = vsyncpa [#allocation6], 1
    %91 = vsyncpa [#allocation4], 1

</llo_original>
